<compile_context>
chip_gen: v5e
topology: v5e:2x2
jax: 0.10.0
libtpu: 0.0.40
codegen_flags: <defaults>
</compile_context>

<pallas_src>
import jax
import jax.numpy as jnp
from jax.experimental import pallas as pl
from jax.experimental.pallas import tpu as pltpu


def _evalnet_kernel(x_ref,
                    w1_ref, b1_ref,
                    w2_ref, b2_ref,
                    w3_ref, b3_ref,
                    out_ref):
    """One batch tile: (TB, 9) -> (1, 1, TB) output row (batch on lanes)."""
    # Layer 1: bf16 MXU matmul, f32 accumulation; bias + ReLU in f32 on the VPU.
    h1 = jnp.dot(x_ref[...], w1_ref[...], preferred_element_type=jnp.float32)
    h1 = jnp.maximum(h1 + b1_ref[...], 0.0)

    # Layer 2: same pattern.
    h2 = jnp.dot(h1.astype(jnp.bfloat16), w2_ref[...],
                 preferred_element_type=jnp.float32)
    h2 = jnp.maximum(h2 + b2_ref[...], 0.0)

    # Layer 3 (out_features == 1): VPU multiply + XLU lane reduce instead of an
    # N=1 MXU matmul; result is relaid out lane-dense for an unmasked store.
    row = jnp.sum(h2 * w3_ref[...], axis=-1, keepdims=True) + b3_ref[...]  # (TB, 1)
    out_ref[...] = row.reshape(1, 1, -1).astype(out_ref.dtype)             # (1, 1, TB)


def evalnet_forward(x, params, *, tb=None):
    """EvalNet forward pass as a single batch-tiled Pallas kernel.

    x: (B, 9) float32
    params: w1 (9,64), b1 (1,64), w2 (64,64), b2 (1,64),
            w3 (1,64)  (PyTorch-native (out,in) row), b3 (1,1), all float32.
    returns: (B, 1) float32
    """
    B, in_size = x.shape

    # Batch tile: 512 (multiple of 256 for v6e/v7x MXU); small batches are
    # rounded up to a single 128-multiple tile.
    if tb is None:
        tb = 512 if B >= 512 else max(128, pl.cdiv(B, 128) * 128)
    num_tiles = pl.cdiv(B, tb)
    b_pad = num_tiles * tb
    if b_pad != B:
        x = jnp.pad(x, ((0, b_pad - B), (0, 0)))

    # bf16 for the operands that feed the MXU (halves HBM traffic for x, the
    # only batch-scaling operand); keep biases and the final row weight in f32.
    x_bf16 = x.astype(jnp.bfloat16)
    w1 = params["w1"].astype(jnp.bfloat16)
    w2 = params["w2"].astype(jnp.bfloat16)
    b1, b2 = params["b1"], params["b2"]
    w3, b3 = params["w3"], params["b3"]

    # Weights/biases (all 2-D): constant index_map -> resident in VMEM across
    # grid steps; block_shape == full array shape so the (8,128) rule is met.
    def resident(a):
        return pl.BlockSpec(a.shape, lambda i: (0, 0))

    out = pl.pallas_call(
        _evalnet_kernel,
        out_shape=jax.ShapeDtypeStruct((num_tiles, 1, tb), jnp.float32),
        grid=(num_tiles,),
        in_specs=[
            pl.BlockSpec((tb, in_size), lambda i: (i, 0)),   # x tile
            resident(w1), resident(b1),
            resident(w2), resident(b2),
            resident(w3), resident(b3),
        ],
        out_specs=pl.BlockSpec((1, 1, tb), lambda i: (i, 0, 0)),
        compiler_params=pltpu.CompilerParams(
            dimension_semantics=("parallel",),
        ),
    )(x_bf16, w1, b1, w2, b2, w3, b3)

    # (num_tiles, 1, TB) -> (B, 1); row-major flatten preserves batch order.
    return out.reshape(b_pad, 1)[:B]


def init_params(key, in_size=9, hidden=64):
    """Deterministic init matching nn.Linear defaults (U(-1/sqrt(fan_in), ...)).

    f1, f2 are stored transposed as (in, out) for direct x @ W matmuls;
    f3 is kept in PyTorch's (out=1, in=hidden) row layout for the lane reduce.
    Biases are 2-D so they broadcast cleanly in the kernel.
    """
    params = {}
    for name, (fi, fo) in (("1", (in_size, hidden)), ("2", (hidden, hidden))):
        key, kw, kb = jax.random.split(key, 3)
        bound = 1.0 / float(jnp.sqrt(fi))
        params[f"w{name}"] = jax.random.uniform(kw, (fi, fo), jnp.float32, -bound, bound)
        params[f"b{name}"] = jax.random.uniform(kb, (1, fo), jnp.float32, -bound, bound)
    key, kw, kb = jax.random.split(key, 3)
    bound = 1.0 / float(jnp.sqrt(hidden))
    params["w3"] = jax.random.uniform(kw, (1, hidden), jnp.float32, -bound, bound)
    params["b3"] = jax.random.uniform(kb, (1, 1), jnp.float32, -bound, bound)
    return params


def _reference_forward(x, params):
    """Pure-JAX f32 reference of EvalNet.forward."""
    h = jnp.maximum(x @ params["w1"] + params["b1"], 0.0)
    h = jnp.maximum(h @ params["w2"] + params["b2"], 0.0)
    return jnp.sum(h * params["w3"], axis=-1, keepdims=True) + params["b3"]


if __name__ == "__main__":
    key = jax.random.PRNGKey(0)
    key, kx = jax.random.split(key)

    B = 8  # small batch consistent with the module (in_size=9, hidden=64)
    x = jax.random.normal(kx, (B, 9), jnp.float32)
    params = init_params(key)

    out = jax.block_until_ready(evalnet_forward(x, params))
    ref = _reference_forward(x, params)

    assert out.shape == (B, 1), out.shape
    # bf16 MXU inputs vs f32 reference -> relaxed tolerance.
    assert jnp.allclose(out, ref, atol=3e-2, rtol=3e-2), "mismatch vs reference"

    print("KERNEL_OK")
</pallas_src>

<mosaic_0001>
module attributes {stable_mosaic.version = 11 : i64} {
  func.func @_evalnet_kernel(%arg0: i32, %arg1: memref<128x9xbf16, #tpu.memory_space<vmem>>, %arg2: memref<9x64xbf16, #tpu.memory_space<vmem>>, %arg3: memref<1x64xf32, #tpu.memory_space<vmem>>, %arg4: memref<64x64xbf16, #tpu.memory_space<vmem>>, %arg5: memref<1x64xf32, #tpu.memory_space<vmem>>, %arg6: memref<1x64xf32, #tpu.memory_space<vmem>>, %arg7: memref<1x1xf32, #tpu.memory_space<vmem>>, %arg8: memref<1x1x128xf32, #tpu.memory_space<vmem>>) attributes {dimension_semantics = [#tpu.dimension_semantics<parallel>], iteration_bounds = array<i64: 1>, scalar_prefetch = 0 : i64, scratch_operands = 0 : i64, tpu.core_type = #tpu.core_type<tc>, window_params = [{transform_indices = @transform_0, window_bounds = array<i64: 128, 9>}, {pipeline_mode = #tpu.pipeline_mode<synchronous>, transform_indices = @transform_1, window_bounds = array<i64: 9, 64>}, {pipeline_mode = #tpu.pipeline_mode<synchronous>, transform_indices = @transform_2, window_bounds = array<i64: 1, 64>}, {pipeline_mode = #tpu.pipeline_mode<synchronous>, transform_indices = @transform_3, window_bounds = array<i64: 64, 64>}, {pipeline_mode = #tpu.pipeline_mode<synchronous>, transform_indices = @transform_4, window_bounds = array<i64: 1, 64>}, {pipeline_mode = #tpu.pipeline_mode<synchronous>, transform_indices = @transform_5, window_bounds = array<i64: 1, 64>}, {pipeline_mode = #tpu.pipeline_mode<synchronous>, transform_indices = @transform_6, window_bounds = array<i64: 1, 1>}, {transform_indices = @transform_7, window_bounds = array<i64: 1, 1, 128>}]} {
    %c0 = arith.constant 0 : index
    %c0_0 = arith.constant 0 : index
    %0 = vector.load %arg1[%c0, %c0_0] : memref<128x9xbf16, #tpu.memory_space<vmem>>, vector<128x9xbf16>
    %c0_1 = arith.constant 0 : index
    %c0_2 = arith.constant 0 : index
    %1 = vector.load %arg2[%c0_1, %c0_2] : memref<9x64xbf16, #tpu.memory_space<vmem>>, vector<9x64xbf16>
    %cst = arith.constant dense<0.000000e+00> : vector<128x64xf32>
    %2 = tpu.matmul %0, %1, %cst {dimension_numbers = #tpu.dot_dimension_numbers<[1], [0], [0], [1], [0, 0, 1, 1], [], []>} : vector<128x9xbf16>, vector<9x64xbf16>, vector<128x64xf32> -> vector<128x64xf32>
    %c0_3 = arith.constant 0 : index
    %c0_4 = arith.constant 0 : index
    %3 = vector.load %arg3[%c0_3, %c0_4] : memref<1x64xf32, #tpu.memory_space<vmem>>, vector<1x64xf32>
    %4 = vector.broadcast %3 : vector<1x64xf32> to vector<128x64xf32>
    %5 = arith.addf %2, %4 : vector<128x64xf32>
    %cst_5 = arith.constant 0.000000e+00 : f32
    %6 = vector.broadcast %cst_5 : f32 to vector<128x64xf32>
    %7 = arith.maximumf %5, %6 : vector<128x64xf32>
    %8 = arith.truncf %7 : vector<128x64xf32> to vector<128x64xbf16>
    %c0_6 = arith.constant 0 : index
    %c0_7 = arith.constant 0 : index
    %9 = vector.load %arg4[%c0_6, %c0_7] : memref<64x64xbf16, #tpu.memory_space<vmem>>, vector<64x64xbf16>
    %cst_8 = arith.constant dense<0.000000e+00> : vector<128x64xf32>
    %10 = tpu.matmul %8, %9, %cst_8 {dimension_numbers = #tpu.dot_dimension_numbers<[1], [0], [0], [1], [0, 0, 1, 1], [], []>} : vector<128x64xbf16>, vector<64x64xbf16>, vector<128x64xf32> -> vector<128x64xf32>
    %c0_9 = arith.constant 0 : index
    %c0_10 = arith.constant 0 : index
    %11 = vector.load %arg5[%c0_9, %c0_10] : memref<1x64xf32, #tpu.memory_space<vmem>>, vector<1x64xf32>
    %12 = vector.broadcast %11 : vector<1x64xf32> to vector<128x64xf32>
    %13 = arith.addf %10, %12 : vector<128x64xf32>
    %cst_11 = arith.constant 0.000000e+00 : f32
    %14 = vector.broadcast %cst_11 : f32 to vector<128x64xf32>
    %15 = arith.maximumf %13, %14 : vector<128x64xf32>
    %c0_12 = arith.constant 0 : index
    %c0_13 = arith.constant 0 : index
    %16 = vector.load %arg6[%c0_12, %c0_13] : memref<1x64xf32, #tpu.memory_space<vmem>>, vector<1x64xf32>
    %17 = vector.broadcast %16 : vector<1x64xf32> to vector<128x64xf32>
    %18 = arith.mulf %15, %17 : vector<128x64xf32>
    %cst_14 = arith.constant dense<0.000000e+00> : vector<128xf32>
    %19 = vector.multi_reduction <add>, %18, %cst_14 [1] : vector<128x64xf32> to vector<128xf32>
    %20 = vector.shape_cast %19 : vector<128xf32> to vector<128x1xf32>
    %c0_15 = arith.constant 0 : index
    %c0_16 = arith.constant 0 : index
    %21 = vector.load %arg7[%c0_15, %c0_16] : memref<1x1xf32, #tpu.memory_space<vmem>>, vector<1x1xf32>
    %22 = vector.broadcast %21 : vector<1x1xf32> to vector<128x1xf32>
    %23 = arith.addf %20, %22 : vector<128x1xf32>
    %24 = vector.shape_cast %23 : vector<128x1xf32> to vector<1x1x128xf32>
    %c0_17 = arith.constant 0 : index
    %c0_18 = arith.constant 0 : index
    %c0_19 = arith.constant 0 : index
    %25 = vector.load %arg8[%c0_17, %c0_18, %c0_19] : memref<1x1x128xf32, #tpu.memory_space<vmem>>, vector<1x1x128xf32>
    tpu.vector_store %arg8[%c0_17, %c0_18, %c0_19], %24 {strides = array<i32>} : memref<1x1x128xf32, #tpu.memory_space<vmem>>, vector<1x1x128xf32>,
    return
  }
  func.func @transform_0(%arg0: i32) -> (i32, i32) {
    %c0_i32 = arith.constant 0 : i32
    %c0_i32_0 = arith.constant 0 : i32
    return %arg0, %c0_i32 : i32, i32
  }
  func.func @transform_1(%arg0: i32) -> (i32, i32) {
    %c0_i32 = arith.constant 0 : i32
    %c0_i32_0 = arith.constant 0 : i32
    %c0_i32_1 = arith.constant 0 : i32
    return %c0_i32, %c0_i32_0 : i32, i32
  }
  func.func @transform_2(%arg0: i32) -> (i32, i32) {
    %c0_i32 = arith.constant 0 : i32
    %c0_i32_0 = arith.constant 0 : i32
    %c0_i32_1 = arith.constant 0 : i32
    return %c0_i32, %c0_i32_0 : i32, i32
  }
  func.func @transform_3(%arg0: i32) -> (i32, i32) {
    %c0_i32 = arith.constant 0 : i32
    %c0_i32_0 = arith.constant 0 : i32
    %c0_i32_1 = arith.constant 0 : i32
    return %c0_i32, %c0_i32_0 : i32, i32
  }
  func.func @transform_4(%arg0: i32) -> (i32, i32) {
    %c0_i32 = arith.constant 0 : i32
    %c0_i32_0 = arith.constant 0 : i32
    %c0_i32_1 = arith.constant 0 : i32
    return %c0_i32, %c0_i32_0 : i32, i32
  }
  func.func @transform_5(%arg0: i32) -> (i32, i32) {
    %c0_i32 = arith.constant 0 : i32
    %c0_i32_0 = arith.constant 0 : i32
    %c0_i32_1 = arith.constant 0 : i32
    return %c0_i32, %c0_i32_0 : i32, i32
  }
  func.func @transform_6(%arg0: i32) -> (i32, i32) {
    %c0_i32 = arith.constant 0 : i32
    %c0_i32_0 = arith.constant 0 : i32
    %c0_i32_1 = arith.constant 0 : i32
    return %c0_i32, %c0_i32_0 : i32, i32
  }
  func.func @transform_7(%arg0: i32) -> (i32, i32, i32) {
    %c0_i32 = arith.constant 0 : i32
    %c0_i32_0 = arith.constant 0 : i32
    %c0_i32_1 = arith.constant 0 : i32
    return %arg0, %c0_i32, %c0_i32_0 : i32, i32, i32
  }
}

</mosaic_0001>

<llo_original>
// kernel: tpu_custom_call.1
$region0: #{tpu_custom_call.1}
  #allocation0 [shape = 'u32[]', space=smem, size = 0x4, offset = 0x4, fixed_abs, tag = 'smem constant byte address 0x4 - core index']
  #allocation1 [shape = 'u32[72,128]{1,0:T(1,128)}', space=vmem, size = 0x9000, scoped, tag = 'internal scratch']
  #allocation2 [shape = 'f32[1,1]{1,0:T(1,128)S(1)}', space=vmem, size = 0x200, scoped, tag = 'scoped memory for tpu_custom_call.1']
  %s0 = inlined_call_operand.vmem [shape: bf16[128,9], index: 0, kind: input, shape index: {}]
  %s1 = inlined_call_operand.vmem [shape: bf16[9,64], index: 1, kind: input, shape index: {}]
  %s2 = inlined_call_operand.vmem [shape: f32[1,64], index: 2, kind: input, shape index: {}]
  %s3 = inlined_call_operand.vmem [shape: bf16[64,64], index: 3, kind: input, shape index: {}]
  %s4 = inlined_call_operand.vmem [shape: f32[1,64], index: 4, kind: input, shape index: {}]
  %s5 = inlined_call_operand.vmem [shape: f32[1,64], index: 5, kind: input, shape index: {}]
  %s6 = inlined_call_operand.<no memory space> [shape: f32[1,1], index: 6, kind: input, shape index: {}]
  %s7 = inlined_call_operand.hbm [shape: f32[1,1,128], index: 7, kind: output, shape index: {}]
  %s8 = sld [smem:[#allocation0]]
  $region38: #{tpu_custom_call.1} parent=0
    _
  %s10 = ssub.s32 1, %s8
  %s11 = scalar_select 0, %s10, %s8
  %v12 = vstv %s6
  %13 = vst [vmem:[#allocation2] sm:$0x1] %v12
  $region1: #{tpu_custom_call.1} parent=0
    #allocation3 [shape = 'u8[512]{0}', space=vmem, size = 0x400, scoped, tag = 'output window, operand 0, single buffered']
    #allocation4 [shape = 's32[1]{0}', space=sflag, size = 0x4, scoped, tag = 'scoped memory for tpu_custom_call.1']
    %14 = vsyncpa [#allocation4], 0
    // Predicated region
    $region2: #{tpu_custom_call.1} parent=1 // pred_check
      _
    $region3: #{tpu_custom_call.1} parent=1 // pred_check_branch
      %16 = sbr.rel (0) target = $region5
    $region4: #{tpu_custom_call.1} parent=1 // pred_region
      _
    $region5: #{tpu_custom_call.1} parent=1 // pred_fallthru
      _
    // Predicated region
    $region6: #{tpu_custom_call.1} parent=1 // pred_check
      _
    $region7: #{tpu_custom_call.1} parent=1 // pred_check_branch
      %18 = sbr.rel (0) target = $region9
    $region8: #{tpu_custom_call.1} parent=1 // pred_region
      _
    $region9: #{tpu_custom_call.1} parent=1 // pred_fallthru
      _
    // Predicated region
    $region10: #{tpu_custom_call.1} parent=1 // pred_check
      _
    $region11: #{tpu_custom_call.1} parent=1 // pred_check_branch
      %20 = sbr.rel (0) target = $region13
    $region12: #{tpu_custom_call.1} parent=1 // pred_region
      _
    $region13: #{tpu_custom_call.1} parent=1 // pred_fallthru
      _
    // Predicated region
    $region14: #{tpu_custom_call.1} parent=1 // pred_check
      _
    $region15: #{tpu_custom_call.1} parent=1 // pred_check_branch
      %22 = sbr.rel (0) target = $region17
    $region16: #{tpu_custom_call.1} parent=1 // pred_region
      _
    $region17: #{tpu_custom_call.1} parent=1 // pred_fallthru
      _
    // Predicated region
    $region18: #{tpu_custom_call.1} parent=1 // pred_check
      _
    $region19: #{tpu_custom_call.1} parent=1 // pred_check_branch
      %24 = sbr.rel (0) target = $region21
    $region20: #{tpu_custom_call.1} parent=1 // pred_region
      _
    $region21: #{tpu_custom_call.1} parent=1 // pred_fallthru
      _
    // Predicated region
    $region22: #{tpu_custom_call.1} parent=1 // pred_check
      _
    $region23: #{tpu_custom_call.1} parent=1 // pred_check_branch
      %26 = sbr.rel (0) target = $region25
    $region24: #{tpu_custom_call.1} parent=1 // pred_region
      _
    $region25: #{tpu_custom_call.1} parent=1 // pred_fallthru
      _
    // Predicated region
    $region26: #{tpu_custom_call.1} parent=1 // pred_check
      _
    $region27: #{tpu_custom_call.1} parent=1 // pred_check_branch
      %28 = sbr.rel (0) target = $region29
    $region28: #{tpu_custom_call.1} parent=1 // pred_region
      _
    $region29: #{tpu_custom_call.1} parent=1 // pred_fallthru
      _
    %v30 = vld [vmem:[%s0] sm:$0xf]
    %v31 = vld [vmem:[%s0 + $0x4] sm:$0xf]
    %v32 = vld [vmem:[%s0 + $0x8] sm:$0xf]
    %v33 = vld [vmem:[%s0 + $0xc] sm:$0xf]
    %v34 = vld [vmem:[%s0 + $0x10] sm:$0xf]
    %v35 = vld [vmem:[%s0 + $0x14] sm:$0xf]
    %v36 = vld [vmem:[%s0 + $0x18] sm:$0xf]
    %v37 = vld [vmem:[%s0 + $0x1c] sm:$0xf]
    %v38 = vld [vmem:[%s0 + $0x20] sm:$0xf]
    %v39 = vld [vmem:[%s0 + $0x24] sm:$0xf]
    %v40 = vld [vmem:[%s0 + $0x28] sm:$0xf]
    %v41 = vld [vmem:[%s0 + $0x2c] sm:$0xf]
    %v42 = vld [vmem:[%s0 + $0x30] sm:$0xf]
    %v43 = vld [vmem:[%s0 + $0x34] sm:$0xf]
    %v44 = vld [vmem:[%s0 + $0x38] sm:$0xf]
    %v45 = vld [vmem:[%s0 + $0x3c] sm:$0xf]
    %v46 = vld [vmem:[%s1] sm:$0xf]
    %v47 = vld [vmem:[%s1 + $0x4] sm:$0x1]
    %v48 = vld [vmem:[%s2] sm:$0x1]
    %v50 = vperm.slane %v48, 0
    %v68 = vunpack.c.l.b16 %v30
    %v69 = vunpack.c.l.b16 %v31
    %v70 = vunpack.c.l.b16 %v32
    %v71 = vunpack.c.l.b16 %v33
    %v72 = vunpack.c.l.b16 %v34
    %v73 = vunpack.c.l.b16 %v35
    %v74 = vunpack.c.l.b16 %v36
    %v75 = vunpack.c.l.b16 %v37
    %v76 = vunpack.c.l.b16 %v38
    %v77 = vunpack.c.l.b16 %v39
    %v78 = vunpack.c.l.b16 %v40
    %v79 = vunpack.c.l.b16 %v41
    %v80 = vunpack.c.l.b16 %v42
    %v81 = vunpack.c.l.b16 %v43
    %v82 = vunpack.c.l.b16 %v44
    %v83 = vunpack.c.l.b16 %v45
    %v84 = vpack.c.b16 %v69, %v68
    %v85 = vpack.c.b16 %v71, %v70
    %v86 = vpack.c.b16 %v73, %v72
    %v87 = vpack.c.b16 %v75, %v74
    %v88 = vpack.c.b16 %v77, %v76
    %v89 = vpack.c.b16 %v79, %v78
    %v90 = vpack.c.b16 %v81, %v80
    %v91 = vpack.c.b16 %v83, %v82
    %v94 = vunpack.c.l.b16 %v46
    %v95 = vunpack.c.l.b16 %v47
    %v96 = vpack.c.b16 %v95, %v94
    %vm97 = vcmask 72704
    %v99 = vsel %vm97, %v84, 0
    %v102 = vsel %vm97, %v85, 0
    %v105 = vsel %vm97, %v86, 0
    %v108 = vsel %vm97, %v87, 0
    %v111 = vsel %vm97, %v88, 0
    %v114 = vsel %vm97, %v89, 0
    %v117 = vsel %vm97, %v90, 0
    %v120 = vsel %vm97, %v91, 0
    %vm122 = vcmask 1043456
    %vm123 = vcmask 1044480
    %v124 = vsel %vm122, 4294967295, 65535
    %v125 = vsel %vm123, %v124, 0
    %v127 = vand.u32 %v96, %v125
    %129 = vmatpush.bf16.msra.mxu0 0
    %130 = vmatpush.bf16.msra.mxu0 0
    %131 = vmatpush.bf16.msra.mxu0 0
    %132 = vmatpush.bf16.msra.mxu0 0
    %133 = vmatpush.bf16.msra.mxu0 0
    %134 = vmatpush.bf16.msra.mxu0 0
    %135 = vmatpush.bf16.msra.mxu0 0
    %136 = vmatpush.bf16.msra.mxu0 %v127
    %137 = vmatmul.bf16.gmra.mxu0 %v99
    %v138 = vpop.f32.mrf.mxu0
    %v139 = vadd.f32 %v50, %v138
    %v140 = vpop.f32.mrf.mxu0
    %v141 = vadd.f32 %v50, %v140
    %142 = vmatmul.bf16.gmra.mxu0 %v102
    %v143 = vpop.f32.mrf.mxu0
    %v144 = vadd.f32 %v50, %v143
    %v145 = vpop.f32.mrf.mxu0
    %v146 = vadd.f32 %v50, %v145
    %147 = vmatmul.bf16.gmra.mxu0 %v105
    %v148 = vpop.f32.mrf.mxu0
    %v149 = vadd.f32 %v50, %v148
    %v150 = vpop.f32.mrf.mxu0
    %v151 = vadd.f32 %v50, %v150
    %152 = vmatmul.bf16.gmra.mxu0 %v108
    %v153 = vpop.f32.mrf.mxu0
    %v154 = vadd.f32 %v50, %v153
    %v155 = vpop.f32.mrf.mxu0
    %v156 = vadd.f32 %v50, %v155
    %157 = vmatmul.bf16.gmra.mxu0 %v111
    %v158 = vpop.f32.mrf.mxu0
    %v159 = vadd.f32 %v50, %v158
    %v160 = vpop.f32.mrf.mxu0
    %v161 = vadd.f32 %v50, %v160
    %162 = vmatmul.bf16.gmra.mxu0 %v114
    %v163 = vpop.f32.mrf.mxu0
    %v164 = vadd.f32 %v50, %v163
    %v165 = vpop.f32.mrf.mxu0
    %v166 = vadd.f32 %v50, %v165
    %167 = vmatmul.bf16.gmra.mxu0 %v117
    %v168 = vpop.f32.mrf.mxu0
    %v169 = vadd.f32 %v50, %v168
    %v170 = vpop.f32.mrf.mxu0
    %v171 = vadd.f32 %v50, %v170
    %172 = vmatmul.bf16.gmra.mxu0 %v120
    %v173 = vpop.f32.mrf.mxu0
    %v174 = vadd.f32 %v50, %v173
    %v175 = vpop.f32.mrf.mxu0
    %v176 = vadd.f32 %v50, %v175
    %177 = vdwg.mxu0
    %v178 = vmax.f32 %v139, 0.0
    %v179 = vmax.f32 %v141, 0.0
    %v180 = vmax.f32 %v144, 0.0
    %v181 = vmax.f32 %v146, 0.0
    %v182 = vmax.f32 %v149, 0.0
    %v183 = vmax.f32 %v151, 0.0
    %v184 = vmax.f32 %v154, 0.0
    %v185 = vmax.f32 %v156, 0.0
    %v186 = vmax.f32 %v159, 0.0
    %v187 = vmax.f32 %v161, 0.0
    %v188 = vmax.f32 %v164, 0.0
    %v189 = vmax.f32 %v166, 0.0
    %v190 = vmax.f32 %v169, 0.0
    %v191 = vmax.f32 %v171, 0.0
    %v192 = vmax.f32 %v174, 0.0
    %v193 = vmax.f32 %v176, 0.0
    %v194 = vpack.c.bf16 %v179, %v178
    %v195 = vpack.c.bf16 %v181, %v180
    %v196 = vpack.c.bf16 %v183, %v182
    %v197 = vpack.c.bf16 %v185, %v184
    %v198 = vpack.c.bf16 %v187, %v186
    %v199 = vpack.c.bf16 %v189, %v188
    %v200 = vpack.c.bf16 %v191, %v190
    %v201 = vpack.c.bf16 %v193, %v192
    %v202 = vld [vmem:[%s3] sm:$0xf]
    %v203 = vld [vmem:[%s3 + $0x4] sm:$0xf]
    %v204 = vld [vmem:[%s3 + $0x8] sm:$0xf]
    %v205 = vld [vmem:[%s3 + $0xc] sm:$0xf]
    %v206 = vld [vmem:[%s3 + $0x10] sm:$0xf]
    %v207 = vld [vmem:[%s3 + $0x14] sm:$0xf]
    %v208 = vld [vmem:[%s3 + $0x18] sm:$0xf]
    %v209 = vld [vmem:[%s3 + $0x1c] sm:$0xf]
    %v210 = vld [vmem:[%s4] sm:$0x1]
    %v212 = vperm.slane %v210, 0
    %v222 = vunpack.c.l.b16 %v202
    %v223 = vunpack.c.l.b16 %v203
    %v224 = vunpack.c.l.b16 %v204
    %v225 = vunpack.c.l.b16 %v205
    %v226 = vunpack.c.l.b16 %v206
    %v227 = vunpack.c.l.b16 %v207
    %v228 = vunpack.c.l.b16 %v208
    %v229 = vunpack.c.l.b16 %v209
    %v230 = vpack.c.b16 %v223, %v222
    %v231 = vpack.c.b16 %v225, %v224
    %v232 = vpack.c.b16 %v227, %v226
    %v233 = vpack.c.b16 %v229, %v228
    %vm238 = vcmask 523264
    %v240 = vsel %vm238, %v194, 0
    %v243 = vsel %vm238, %v195, 0
    %v246 = vsel %vm238, %v196, 0
    %v249 = vsel %vm238, %v197, 0
    %v252 = vsel %vm238, %v198, 0
    %v255 = vsel %vm238, %v199, 0
    %v258 = vsel %vm238, %v200, 0
    %v261 = vsel %vm238, %v201, 0
    %263 = vmatpush.bf16.msra.mxu0 0
    %264 = vmatpush.bf16.msra.mxu0 0
    %265 = vmatpush.bf16.msra.mxu0 0
    %266 = vmatpush.bf16.msra.mxu0 0
    %267 = vmatpush.bf16.msra.mxu0 %v233
    %268 = vmatpush.bf16.msra.mxu0 %v232
    %269 = vmatpush.bf16.msra.mxu0 %v231
    %270 = vmatpush.bf16.msra.mxu0 %v230
    %271 = vmatmul.bf16.gmra.mxu0 %v240
    %v272 = vpop.f32.mrf.mxu0
    %v273 = vadd.f32 %v212, %v272
    %v274 = vpop.f32.mrf.mxu0
    %v275 = vadd.f32 %v212, %v274
    %276 = vmatmul.bf16.gmra.mxu0 %v243
    %v277 = vpop.f32.mrf.mxu0
    %v278 = vadd.f32 %v212, %v277
    %v279 = vpop.f32.mrf.mxu0
    %v280 = vadd.f32 %v212, %v279
    %281 = vmatmul.bf16.gmra.mxu0 %v246
    %v282 = vpop.f32.mrf.mxu0
    %v283 = vadd.f32 %v212, %v282
    %v284 = vpop.f32.mrf.mxu0
    %v285 = vadd.f32 %v212, %v284
    %286 = vmatmul.bf16.gmra.mxu0 %v249
    %v287 = vpop.f32.mrf.mxu0
    %v288 = vadd.f32 %v212, %v287
    %v289 = vpop.f32.mrf.mxu0
    %v290 = vadd.f32 %v212, %v289
    %291 = vmatmul.bf16.gmra.mxu0 %v252
    %v292 = vpop.f32.mrf.mxu0
    %v293 = vadd.f32 %v212, %v292
    %v294 = vpop.f32.mrf.mxu0
    %v295 = vadd.f32 %v212, %v294
    %296 = vmatmul.bf16.gmra.mxu0 %v255
    %v297 = vpop.f32.mrf.mxu0
    %v298 = vadd.f32 %v212, %v297
    %v299 = vpop.f32.mrf.mxu0
    %v300 = vadd.f32 %v212, %v299
    %301 = vmatmul.bf16.gmra.mxu0 %v258
    %v302 = vpop.f32.mrf.mxu0
    %v303 = vadd.f32 %v212, %v302
    %v304 = vpop.f32.mrf.mxu0
    %v305 = vadd.f32 %v212, %v304
    %306 = vmatmul.bf16.gmra.mxu0 %v261
    %v307 = vpop.f32.mrf.mxu0
    %v308 = vadd.f32 %v212, %v307
    %v309 = vpop.f32.mrf.mxu0
    %v310 = vadd.f32 %v212, %v309
    %311 = vdwg.mxu0
    %v312 = vmax.f32 %v273, 0.0
    %v313 = vmax.f32 %v275, 0.0
    %v314 = vmax.f32 %v278, 0.0
    %v315 = vmax.f32 %v280, 0.0
    %v316 = vmax.f32 %v283, 0.0
    %v317 = vmax.f32 %v285, 0.0
    %v318 = vmax.f32 %v288, 0.0
    %v319 = vmax.f32 %v290, 0.0
    %v320 = vmax.f32 %v293, 0.0
    %v321 = vmax.f32 %v295, 0.0
    %v322 = vmax.f32 %v298, 0.0
    %v323 = vmax.f32 %v300, 0.0
    %v324 = vmax.f32 %v303, 0.0
    %v325 = vmax.f32 %v305, 0.0
    %v326 = vmax.f32 %v308, 0.0
    %v327 = vmax.f32 %v310, 0.0
    %v328 = vld [vmem:[%s5] sm:$0x1]
    %v330 = vperm.slane %v328, 0
    %v332 = vmul.f32 %v312, %v330
    %v333 = vmul.f32 %v313, %v330
    %v334 = vmul.f32 %v314, %v330
    %v335 = vmul.f32 %v315, %v330
    %v336 = vmul.f32 %v316, %v330
    %v337 = vmul.f32 %v317, %v330
    %v338 = vmul.f32 %v318, %v330
    %v339 = vmul.f32 %v319, %v330
    %v340 = vmul.f32 %v320, %v330
    %v341 = vmul.f32 %v321, %v330
    %v342 = vmul.f32 %v322, %v330
    %v343 = vmul.f32 %v323, %v330
    %v344 = vmul.f32 %v324, %v330
    %v345 = vmul.f32 %v325, %v330
    %v346 = vmul.f32 %v326, %v330
    %v347 = vmul.f32 %v327, %v330
    %v348 = vsel %vm238, %v332, 0.0
    %349 = vadd.xlane.f32.xlu0 %v348
    %v350 = vpop.xlane.xlu0 %349
    %v351 = vsel %vm238, %v333, 0.0
    %352 = vadd.xlane.f32.xlu0 %v351
    %v353 = vpop.xlane.xlu0 %352
    %v354 = vsel %vm238, %v334, 0.0
    %355 = vadd.xlane.f32.xlu0 %v354
    %v356 = vpop.xlane.xlu0 %355
    %v357 = vsel %vm238, %v335, 0.0
    %358 = vadd.xlane.f32.xlu0 %v357
    %v359 = vpop.xlane.xlu0 %358
    %v360 = vsel %vm238, %v336, 0.0
    %361 = vadd.xlane.f32.xlu0 %v360
    %v362 = vpop.xlane.xlu0 %361
    %v363 = vsel %vm238, %v337, 0.0
    %364 = vadd.xlane.f32.xlu0 %v363
    %v365 = vpop.xlane.xlu0 %364
    %v366 = vsel %vm238, %v338, 0.0
    %367 = vadd.xlane.f32.xlu0 %v366
    %v368 = vpop.xlane.xlu0 %367
    %v369 = vsel %vm238, %v339, 0.0
    %370 = vadd.xlane.f32.xlu0 %v369
    %v371 = vpop.xlane.xlu0 %370
    %v372 = vsel %vm238, %v340, 0.0
    %373 = vadd.xlane.f32.xlu0 %v372
    %v374 = vpop.xlane.xlu0 %373
    %v375 = vsel %vm238, %v341, 0.0
    %376 = vadd.xlane.f32.xlu0 %v375
    %v377 = vpop.xlane.xlu0 %376
    %v378 = vsel %vm238, %v342, 0.0
    %379 = vadd.xlane.f32.xlu0 %v378
    %v380 = vpop.xlane.xlu0 %379
    %v381 = vsel %vm238, %v343, 0.0
    %382 = vadd.xlane.f32.xlu0 %v381
    %v383 = vpop.xlane.xlu0 %382
    %v384 = vsel %vm238, %v344, 0.0
    %385 = vadd.xlane.f32.xlu0 %v384
    %v386 = vpop.xlane.xlu0 %385
    %v387 = vsel %vm238, %v345, 0.0
    %388 = vadd.xlane.f32.xlu0 %v387
    %v389 = vpop.xlane.xlu0 %388
    %v390 = vsel %vm238, %v346, 0.0
    %391 = vadd.xlane.f32.xlu0 %v390
    %v392 = vpop.xlane.xlu0 %391
    %v393 = vsel %vm238, %v347, 0.0
    %394 = vadd.xlane.f32.xlu0 %v393
    %v395 = vpop.xlane.xlu0 %394
    %v396 = vld [vmem:[#allocation2] sm:$0x1]
    %v398 = vperm.slane %v396, 0
    %v400 = vadd.f32 %v350, %v398
    %v401 = vadd.f32 %v353, %v398
    %v402 = vadd.f32 %v356, %v398
    %v403 = vadd.f32 %v359, %v398
    %v404 = vadd.f32 %v362, %v398
    %v405 = vadd.f32 %v365, %v398
    %v406 = vadd.f32 %v368, %v398
    %v407 = vadd.f32 %v371, %v398
    %v408 = vadd.f32 %v374, %v398
    %v409 = vadd.f32 %v377, %v398
    %v410 = vadd.f32 %v380, %v398
    %v411 = vadd.f32 %v383, %v398
    %v412 = vadd.f32 %v386, %v398
    %v413 = vadd.f32 %v389, %v398
    %v414 = vadd.f32 %v392, %v398
    %v415 = vadd.f32 %v395, %v398
    %432 = vset.pattern.permute.xlu0 0
    %433 = vperm.xlu0 %432, %v400
    %v434 = vpop.permute.xlu0 %433
    %435 = vset.pattern.permute.xlu0 0
    %436 = vperm.xlu0 %435, %v401
    %v437 = vpop.permute.xlu0 %436
    %438 = vset.pattern.permute.xlu0 0
    %439 = vperm.xlu0 %438, %v402
    %v440 = vpop.permute.xlu0 %439
    %441 = vset.pattern.permute.xlu0 0
    %442 = vperm.xlu0 %441, %v403
    %v443 = vpop.permute.xlu0 %442
    %444 = vset.pattern.permute.xlu0 0
    %445 = vperm.xlu0 %444, %v404
    %v446 = vpop.permute.xlu0 %445
    %447 = vset.pattern.permute.xlu0 0
    %448 = vperm.xlu0 %447, %v405
    %v449 = vpop.permute.xlu0 %448
    %450 = vset.pattern.permute.xlu0 0
    %451 = vperm.xlu0 %450, %v406
    %v452 = vpop.permute.xlu0 %451
    %453 = vset.pattern.permute.xlu0 0
    %454 = vperm.xlu0 %453, %v407
    %v455 = vpop.permute.xlu0 %454
    %456 = vset.pattern.permute.xlu0 0
    %457 = vperm.xlu0 %456, %v408
    %v458 = vpop.permute.xlu0 %457
    %459 = vset.pattern.permute.xlu0 0
    %460 = vperm.xlu0 %459, %v409
    %v461 = vpop.permute.xlu0 %460
    %462 = vset.pattern.permute.xlu0 0
    %463 = vperm.xlu0 %462, %v410
    %v464 = vpop.permute.xlu0 %463
    %465 = vset.pattern.permute.xlu0 0
    %466 = vperm.xlu0 %465, %v411
    %v467 = vpop.permute.xlu0 %466
    %468 = vset.pattern.permute.xlu0 0
    %469 = vperm.xlu0 %468, %v412
    %v470 = vpop.permute.xlu0 %469
    %471 = vset.pattern.permute.xlu0 0
    %472 = vperm.xlu0 %471, %v413
    %v473 = vpop.permute.xlu0 %472
    %474 = vset.pattern.permute.xlu0 0
    %475 = vperm.xlu0 %474, %v414
    %v476 = vpop.permute.xlu0 %475
    %477 = vset.pattern.permute.xlu0 0
    %478 = vperm.xlu0 %477, %v415
    %v479 = vpop.permute.xlu0 %478
    %v480 = vlaneseq
    %v481 = vand.u32 %v480, 127
    %v482 = vperm.slane %v434, %v481
    %v483 = vadd.s32 %v481, 4294967288
    %v484 = vperm.slane %v437, %v483
    %vm485 = vcmask 130112
    %v486 = vsel %vm485, %v484, %v482
    %v487 = vadd.s32 %v481, 4294967280
    %v488 = vperm.slane %v440, %v487
    %vm489 = vcmask 195712
    %v490 = vsel %vm489, %v488, %v486
    %v491 = vadd.s32 %v481, 4294967272
    %v492 = vperm.slane %v443, %v491
    %vm493 = vcmask 261312
    %v494 = vsel %vm493, %v492, %v490
    %v495 = vadd.s32 %v481, 4294967264
    %v496 = vperm.slane %v446, %v495
    %vm497 = vcmask 326912
    %v498 = vsel %vm497, %v496, %v494
    %v499 = vadd.s32 %v481, 4294967256
    %v500 = vperm.slane %v449, %v499
    %vm501 = vcmask 392512
    %v502 = vsel %vm501, %v500, %v498
    %v503 = vadd.s32 %v481, 4294967248
    %v504 = vperm.slane %v452, %v503
    %vm505 = vcmask 458112
    %v506 = vsel %vm505, %v504, %v502
    %v507 = vadd.s32 %v481, 4294967240
    %v508 = vperm.slane %v455, %v507
    %vm509 = vcmask 523712
    %v510 = vsel %vm509, %v508, %v506
    %v511 = vadd.s32 %v481, 4294967232
    %v512 = vperm.slane %v458, %v511
    %vm513 = vcmask 589312
    %v514 = vsel %vm513, %v512, %v510
    %v515 = vadd.s32 %v481, 4294967224
    %v516 = vperm.slane %v461, %v515
    %vm517 = vcmask 654912
    %v518 = vsel %vm517, %v516, %v514
    %v519 = vadd.s32 %v481, 4294967216
    %v520 = vperm.slane %v464, %v519
    %vm521 = vcmask 720512
    %v522 = vsel %vm521, %v520, %v518
    %v523 = vadd.s32 %v481, 4294967208
    %v524 = vperm.slane %v467, %v523
    %vm525 = vcmask 786112
    %v526 = vsel %vm525, %v524, %v522
    %v527 = vadd.s32 %v481, 4294967200
    %v528 = vperm.slane %v470, %v527
    %vm529 = vcmask 851712
    %v530 = vsel %vm529, %v528, %v526
    %v531 = vadd.s32 %v481, 4294967192
    %v532 = vperm.slane %v473, %v531
    %vm533 = vcmask 917312
    %v534 = vsel %vm533, %v532, %v530
    %v535 = vadd.s32 %v481, 4294967184
    %v536 = vperm.slane %v476, %v535
    %vm537 = vcmask 982912
    %v538 = vsel %vm537, %v536, %v534
    %v539 = vadd.s32 %v481, 4294967176
    %v540 = vperm.slane %v479, %v539
    %vm541 = vcmask 1048512
    %v542 = vsel %vm541, %v540, %v538
    %544 = vst [vmem:[#allocation3] sm:$0x1] %v542
    // Predicated region
    $region30: #{tpu_custom_call.1} parent=1 // pred_check
      _
    $region31: #{tpu_custom_call.1} parent=1 // pred_check_branch
      %546 = sbr.rel (0) target = $region33
    $region32: #{tpu_custom_call.1} parent=1 // pred_region
      %548 = vsyncadd [#allocation4], 0
      %s550 = sshll.u32 [#allocation3], 4
      %s551 = int_to_ptr.vmem [resolvable:$true] %s550
      %s552 = sshll.u32 %s7, 4
      %s553 = int_to_ptr.hbm [resolvable:$true] %s552
      %555 = dma.vmem_to_hbm [thread:$0]  %s551, 16, %s553, [#allocation4]
    $region33: #{tpu_custom_call.1} parent=1 // pred_fallthru
      _
    // Predicated region
    $region34: #{tpu_custom_call.1} parent=1 // pred_check
      _
    $region35: #{tpu_custom_call.1} parent=1 // pred_check_branch
      %557 = sbr.rel (0) target = $region37
    $region36: #{tpu_custom_call.1} parent=1 // pred_region
      %559 = dma.done [#allocation4], 16
    $region37: #{tpu_custom_call.1} parent=1 // pred_fallthru
      _
    %560 = vsyncpa [#allocation4], 1

</llo_original>
